<compile_context>
chip_gen: v7x
topology: tpu7x:2x2x1
jax: 0.10.0
libtpu: 0.0.40
codegen_flags: <defaults>
</compile_context>

<pallas_src>
import math

import jax
import jax.numpy as jnp
from jax.experimental import pallas as pl
from jax.experimental.pallas import tpu as pltpu


def _round_up(v: int, m: int) -> int:
    return ((v + m - 1) // m) * m


def sage_conv_relu_kernel(a_ref, xwl_ref, self_ref, invdeg_ref, o_ref):
    # a_ref      : (TM, TK)      bf16  un-normalized neighbor counts A[i_tile, k_tile]
    # xwl_ref    : (NP_COLS, FO) bf16  X @ W_l, fully VMEM-resident (constant block)
    # self_ref   : (TM, FO)      f32   X @ W_r + bias (root branch, precomputed)
    # invdeg_ref : (TM, 1)       f32   1 / max(deg, 1)
    # o_ref      : (TM, FO)      f32   output tile; resident across k -> accumulator
    k = pl.program_id(1)
    tk = a_ref.shape[1]

    @pl.when(k == 0)
    def _init():
        o_ref[...] = jnp.zeros_like(o_ref)

    # Select the k-th slab of the resident XWL (aligned dynamic slice).
    start = pl.multiple_of(k * tk, tk)
    xwl_blk = xwl_ref[pl.ds(start, tk), :]

    # Neighbor-sum accumulation on the bf16 MXU path, f32 accumulation,
    # directly into the resident output tile.
    o_ref[...] += jnp.dot(a_ref[...], xwl_blk,
                          preferred_element_type=jnp.float32)

    @pl.when(k == pl.num_programs(1) - 1)
    def _finalize():
        # Pure VPU finalize: mean-normalize, add root term, ReLU.
        out = o_ref[...] * invdeg_ref[...] + self_ref[...]
        o_ref[...] = jnp.maximum(out, 0.0)


def sage_conv_and_activation(x, edge_index, w_l, w_r, bias, *, tm=256, tk=1024):
    """x: [N, F_in] f32, edge_index: [2, E] int32 (row 0 = src j, row 1 = dst i)."""
    # bf16 A operand packs 16 rows per sublane group -> tm must be a multiple of 16.
    assert tm % 16 == 0 and tk % 128 == 0
    n, f_in = x.shape
    f_out = w_l.shape[1]

    # Lane-aligned feature padding; decoupled row/column padding of the N^2 stream.
    fo = _round_up(f_out, 128)
    np_rows = _round_up(n, tm)   # destination nodes (rows of A, rows of output)
    np_cols = _round_up(n, tk)   # source nodes      (cols of A, rows of XWL)

    src, dst = edge_index[0], edge_index[1]

    # --- plain-JAX glue (O(E) + O(N*F^2) work; only the O(N^2) stream is bf16) ---
    # Dense un-normalized neighbor-count matrix (duplicate edges counted, matching
    # scatter-mean semantics).  bf16 counts are exact for multiplicities <= 256.
    # TODO(synk): for realistically sparse graphs (E << N^2) replace this dense
    # adjacency with a CSR / scalar-prefetch gather kernel, and cache adj/deg
    # across layers for static graphs.
    adj = jnp.zeros((np_rows, np_cols), jnp.bfloat16).at[dst, src].add(1.0)

    deg = jnp.zeros((n,), jnp.float32).at[dst].add(1.0)
    inv_deg = (1.0 / jnp.maximum(deg, 1.0)).reshape(n, 1)
    inv_deg = jnp.pad(inv_deg, ((0, np_rows - n), (0, 0)))

    # Reassociation: A @ (X @ W_l).  X @ W_l is tiny; compute once, cast bf16.
    # TODO(synk): if f_out >> f_in, stream A @ X instead (inner dim min(fi, fo)).
    xf32 = x.astype(jnp.float32)
    xwl = jnp.dot(xf32, w_l.astype(jnp.float32),
                  preferred_element_type=jnp.float32).astype(jnp.bfloat16)
    xwl = jnp.pad(xwl, ((0, np_cols - n), (0, fo - f_out)))

    # Root/self branch + bias precomputed in glue; streamed per row tile.
    self_term = jnp.dot(xf32, w_r.astype(jnp.float32),
                        preferred_element_type=jnp.float32) + bias[None, :]
    self_term = jnp.pad(self_term.astype(jnp.float32),
                        ((0, np_rows - n), (0, fo - f_out)))

    grid = (np_rows // tm, np_cols // tk)

    # VMEM budget (double-buffered worst case), capped at the v7x 64 MiB ceiling.
    vmem_bytes = (
        2 * tm * tk * 2            # A tiles (bf16, double-buffered)
        + 2 * np_cols * fo * 2     # resident XWL (bf16)
        + 2 * tm * fo * 4          # self-term tiles
        + 2 * tm * 128 * 4         # 1/deg column (lane-padded)
        + 2 * tm * fo * 4          # output tiles
    )
    vmem_limit = min(max(2 * vmem_bytes, 32 * 1024 * 1024), 64 * 1024 * 1024)

    cost = pl.CostEstimate(
        flops=2 * np_rows * np_cols * fo,
        transcendentals=0,
        bytes_accessed=(np_rows * np_cols * 2      # A (read once)
                        + np_cols * fo * 2         # XWL (resident, read once)
                        + np_rows * fo * 4         # self term
                        + np_rows * fo * 4         # output
                        + np_rows * 4),            # 1/deg
    )

    out = pl.pallas_call(
        sage_conv_relu_kernel,
        out_shape=jax.ShapeDtypeStruct((np_rows, fo), jnp.float32),
        grid_spec=pltpu.PrefetchScalarGridSpec(
            num_scalar_prefetch=0,
            grid=grid,
            in_specs=[
                pl.BlockSpec((tm, tk), lambda i, k: (i, k)),       # A (bf16)
                pl.BlockSpec((np_cols, fo), lambda i, k: (0, 0)),  # X @ W_l, resident
                pl.BlockSpec((tm, fo), lambda i, k: (i, 0)),       # X @ W_r + b
                pl.BlockSpec((tm, 1), lambda i, k: (i, 0)),        # 1/deg column
            ],
            out_specs=pl.BlockSpec((tm, fo), lambda i, k: (i, 0)),
            scratch_shapes=[],
        ),
        compiler_params=pltpu.CompilerParams(
            dimension_semantics=("parallel", "arbitrary"),
            vmem_limit_bytes=vmem_limit),
        cost_estimate=cost,
    )(adj, xwl, self_term, inv_deg)

    return out[:n, :f_out]


if __name__ == "__main__":
    # Small, deliberately *unaligned* shapes to exercise the padding path.
    N, F_IN, F_OUT, E = 200, 96, 128, 800

    key = jax.random.PRNGKey(0)
    k_x, k_src, k_dst, k_wl, k_wr, k_b = jax.random.split(key, 6)

    x = jax.random.normal(k_x, (N, F_IN), dtype=jnp.float32)
    edge_index = jnp.stack(
        [
            jax.random.randint(k_src, (E,), 0, N, dtype=jnp.int32),
            jax.random.randint(k_dst, (E,), 0, N, dtype=jnp.int32),
        ],
        axis=0,
    )

    # SAGEConv params: lin_l [F_in, F_out] + bias (neighbor branch),
    # lin_r [F_in, F_out] no bias (root branch).
    w_l = jax.random.normal(k_wl, (F_IN, F_OUT), dtype=jnp.float32) * 0.1
    w_r = jax.random.normal(k_wr, (F_IN, F_OUT), dtype=jnp.float32) * 0.1
    bias = jax.random.normal(k_b, (F_OUT,), dtype=jnp.float32) * 0.1

    # Small tiles so the demo exercises a (2, 2) grid and the k-accumulation.
    out = sage_conv_and_activation(x, edge_index, w_l, w_r, bias, tm=128, tk=128)
    out = jax.block_until_ready(out)

    # Pure-JAX f32 reference (HIGHEST precision).
    src, dst = edge_index[0], edge_index[1]
    adj_ref = jnp.zeros((N, N), jnp.float32).at[dst, src].add(1.0)
    deg_ref = adj_ref.sum(axis=1, keepdims=True)
    hi = jax.lax.Precision.HIGHEST
    agg_ref = jnp.dot(adj_ref, x, precision=hi) / jnp.maximum(deg_ref, 1.0)
    ref = jnp.maximum(
        jnp.dot(agg_ref, w_l, precision=hi)
        + jnp.dot(x, w_r, precision=hi)
        + bias[None, :],
        0.0,
    )

    # bf16 is used for the O(N^2) operand, so compare with a modest tolerance.
    assert out.shape == ref.shape
    assert jnp.allclose(out, ref, atol=5e-2, rtol=5e-2), float(
        jnp.max(jnp.abs(out - ref)))

    print("KERNEL_OK")
</pallas_src>

<mosaic_0001>
module attributes {stable_mosaic.version = 11 : i64} {
  func.func @sage_conv_relu_kernel(%arg0: i32, %arg1: i32, %arg2: memref<128x128xbf16, #tpu.memory_space<vmem>>, %arg3: memref<256x128xbf16, #tpu.memory_space<vmem>>, %arg4: memref<128x128xf32, #tpu.memory_space<vmem>>, %arg5: memref<128x1xf32, #tpu.memory_space<vmem>>, %arg6: memref<128x128xf32, #tpu.memory_space<vmem>>) attributes {dimension_semantics = [#tpu.dimension_semantics<parallel>, #tpu.dimension_semantics<arbitrary>], iteration_bounds = array<i64: 2, 2>, scalar_prefetch = 0 : i64, scratch_operands = 0 : i64, tpu.core_type = #tpu.core_type<tc>, window_params = [{transform_indices = @transform_0, window_bounds = array<i64: 128, 128>}, {pipeline_mode = #tpu.pipeline_mode<synchronous>, transform_indices = @transform_1, window_bounds = array<i64: 256, 128>}, {transform_indices = @transform_2, window_bounds = array<i64: 128, 128>}, {transform_indices = @transform_3, window_bounds = array<i64: 128, 1>}, {transform_indices = @transform_4, window_bounds = array<i64: 128, 128>}]} {
    %c0_i32 = arith.constant 0 : i32
    %0 = arith.cmpi eq, %arg1, %c0_i32 : i32
    %1 = arith.extui %0 : i1 to i32
    %c0_i32_0 = arith.constant 0 : i32
    %2 = arith.cmpi ne, %1, %c0_i32_0 : i32
    scf.if %2 {
      %cst_8 = arith.constant 0.000000e+00 : f32
      %15 = vector.broadcast %cst_8 : f32 to vector<128x128xf32>
      %c0_9 = arith.constant 0 : index
      %c0_10 = arith.constant 0 : index
      %16 = vector.load %arg6[%c0_9, %c0_10] : memref<128x128xf32, #tpu.memory_space<vmem>>, vector<128x128xf32>
      tpu.vector_store %arg6[%c0_9, %c0_10], %15 {strides = array<i32>} : memref<128x128xf32, #tpu.memory_space<vmem>>, vector<128x128xf32>,
    } else {
    }
    %c128_i32 = arith.constant 128 : i32
    %3 = arith.muli %arg1, %c128_i32 : i32
    %4 = tpu.assume_multiple %3, 128 : i32
    %5 = arith.index_cast %4 : i32 to index
    %c0 = arith.constant 0 : index
    %6 = vector.load %arg3[%5, %c0] : memref<256x128xbf16, #tpu.memory_space<vmem>>, vector<128x128xbf16>
    %c0_1 = arith.constant 0 : index
    %c0_2 = arith.constant 0 : index
    %7 = vector.load %arg6[%c0_1, %c0_2] : memref<128x128xf32, #tpu.memory_space<vmem>>, vector<128x128xf32>
    %c0_3 = arith.constant 0 : index
    %c0_4 = arith.constant 0 : index
    %8 = vector.load %arg2[%c0_3, %c0_4] : memref<128x128xbf16, #tpu.memory_space<vmem>>, vector<128x128xbf16>
    %cst = arith.constant dense<0.000000e+00> : vector<128x128xf32>
    %9 = tpu.matmul %8, %6, %cst {dimension_numbers = #tpu.dot_dimension_numbers<[1], [0], [0], [1], [0, 0, 1, 1], [], []>} : vector<128x128xbf16>, vector<128x128xbf16>, vector<128x128xf32> -> vector<128x128xf32>
    %10 = arith.addf %7, %9 : vector<128x128xf32>
    %c0_5 = arith.constant 0 : index
    %c0_6 = arith.constant 0 : index
    %11 = vector.load %arg6[%c0_5, %c0_6] : memref<128x128xf32, #tpu.memory_space<vmem>>, vector<128x128xf32>
    tpu.vector_store %arg6[%c0_5, %c0_6], %10 {strides = array<i32>} : memref<128x128xf32, #tpu.memory_space<vmem>>, vector<128x128xf32>,
    %c1_i32 = arith.constant 1 : i32
    %12 = arith.cmpi eq, %arg1, %c1_i32 : i32
    %13 = arith.extui %12 : i1 to i32
    %c0_i32_7 = arith.constant 0 : i32
    %14 = arith.cmpi ne, %13, %c0_i32_7 : i32
    scf.if %14 {
      %c0_8 = arith.constant 0 : index
      %c0_9 = arith.constant 0 : index
      %15 = vector.load %arg6[%c0_8, %c0_9] : memref<128x128xf32, #tpu.memory_space<vmem>>, vector<128x128xf32>
      %c0_10 = arith.constant 0 : index
      %c0_11 = arith.constant 0 : index
      %16 = vector.load %arg5[%c0_10, %c0_11] : memref<128x1xf32, #tpu.memory_space<vmem>>, vector<128x1xf32>
      %17 = vector.broadcast %16 : vector<128x1xf32> to vector<128x128xf32>
      %18 = arith.mulf %15, %17 : vector<128x128xf32>
      %c0_12 = arith.constant 0 : index
      %c0_13 = arith.constant 0 : index
      %19 = vector.load %arg4[%c0_12, %c0_13] : memref<128x128xf32, #tpu.memory_space<vmem>>, vector<128x128xf32>
      %20 = arith.addf %18, %19 : vector<128x128xf32>
      %cst_14 = arith.constant 0.000000e+00 : f32
      %21 = vector.broadcast %cst_14 : f32 to vector<128x128xf32>
      %22 = arith.maximumf %20, %21 : vector<128x128xf32>
      %c0_15 = arith.constant 0 : index
      %c0_16 = arith.constant 0 : index
      %23 = vector.load %arg6[%c0_15, %c0_16] : memref<128x128xf32, #tpu.memory_space<vmem>>, vector<128x128xf32>
      tpu.vector_store %arg6[%c0_15, %c0_16], %22 {strides = array<i32>} : memref<128x128xf32, #tpu.memory_space<vmem>>, vector<128x128xf32>,
    } else {
    }
    return
  }
  func.func @transform_0(%arg0: i32, %arg1: i32) -> (i32, i32) {
    %c0_i32 = arith.constant 0 : i32
    return %arg0, %arg1 : i32, i32
  }
  func.func @transform_1(%arg0: i32, %arg1: i32) -> (i32, i32) {
    %c0_i32 = arith.constant 0 : i32
    %c0_i32_0 = arith.constant 0 : i32
    %c0_i32_1 = arith.constant 0 : i32
    return %c0_i32, %c0_i32_0 : i32, i32
  }
  func.func @transform_2(%arg0: i32, %arg1: i32) -> (i32, i32) {
    %c0_i32 = arith.constant 0 : i32
    %c0_i32_0 = arith.constant 0 : i32
    return %arg0, %c0_i32 : i32, i32
  }
  func.func @transform_3(%arg0: i32, %arg1: i32) -> (i32, i32) {
    %c0_i32 = arith.constant 0 : i32
    %c0_i32_0 = arith.constant 0 : i32
    return %arg0, %c0_i32 : i32, i32
  }
  func.func @transform_4(%arg0: i32, %arg1: i32) -> (i32, i32) {
    %c0_i32 = arith.constant 0 : i32
    %c0_i32_0 = arith.constant 0 : i32
    return %arg0, %c0_i32 : i32, i32
  }
}

</mosaic_0001>

<llo_original>
// kernel: tpu_custom_call.1
$region0: #{tpu_custom_call.1}
  #allocation0 [shape = 'u32[]', space=smem, size = 0x4, offset = 0x4, fixed_abs, tag = 'smem constant byte address 0x4 - core index']
  #allocation1 [shape = 'u32[144,128]{1,0:T(1,128)}', space=vmem, size = 0x12000, scoped, tag = 'internal scratch']
  %s0 = inlined_call_operand.vmem [shape: bf16[256,256], index: 0, kind: input, shape index: {}]
  %s1 = inlined_call_operand.hbm [shape: bf16[256,128], index: 1, kind: input, shape index: {}]
  %s2 = inlined_call_operand.hbm [shape: f32[256,128], index: 2, kind: input, shape index: {}]
  %s3 = inlined_call_operand.vmem [shape: f32[256,1], index: 3, kind: input, shape index: {}]
  %s4 = inlined_call_operand.hbm [shape: f32[256,128], index: 4, kind: output, shape index: {}]
  %s5 = sld [smem:[#allocation0]]
  $region106: #{tpu_custom_call.1} parent=0
    _
  %s7 = ssub.s32 1, %s5
  %s8 = scalar_select 0, %s7, %s5
  $region1: #{tpu_custom_call.1} parent=0
    #allocation2 [shape = 'u8[65536]{0}', space=vmem, size = 0x10000, scoped, tag = 'input window, operand 0']
    #allocation3 [shape = 'u8[65536]{0}', space=vmem, size = 0x10000, scoped, tag = 'input window, operand 1, single buffered']
    #allocation4 [shape = 's32[2]{0}', space=sflag, size = 0x8, scoped, tag = 'scoped memory for tpu_custom_call.1']
    #allocation5 [shape = 's32[2]{0}', space=sflag, size = 0x8, scoped, tag = 'scoped memory for tpu_custom_call.1']
    #allocation6 [shape = 'u8[131072]{0}', space=vmem, size = 0x20000, scoped, tag = 'input window, operand 2']
    #allocation7 [shape = 's32[2]{0}', space=sflag, size = 0x8, scoped, tag = 'scoped memory for tpu_custom_call.1']
    #allocation8 [shape = 'u8[131072]{0}', space=vmem, size = 0x20000, scoped, tag = 'output window, operand 0']
    %9 = vsyncpa [#allocation4], 0
    %10 = vsyncpa [#allocation7], 0
    %s11 = scalar_lea.sflag [#allocation7], 1
    %12 = vsyncpa %s11, 0
    %13 = vsyncpa [#allocation5], 0
    %s14 = scalar_lea.sflag [#allocation5], 1
    %15 = vsyncpa %s14, 0
    loop: start=0, step=1, limit=6
    $region2: #{tpu_custom_call.1} parent=1 // loop_pre_header
      _
    $region3: #{tpu_custom_call.1} parent=1 // loop_header
      %s17 = sphi 0, %s21
      %p18 = scmp.ge.s32.totalorder %s17, 6
      %s24 = sphi 0, %s36
      %s25 = sphi 0, %s32
      %s26 = sphi 0, %s24
      %s27 = sphi 0, %s25
      %s28 = sphi 0, %s26
      %s29 = sphi 0, %s27
      %s41 = sphi 0, %s43
      %s44 = sphi 0, %s41
      %s45 = sphi 0, %s44
      %s61 = sphi 0, %s45
      %s65 = sphi 0, %s65
      %s67 = sphi 0, %s65
      %s68 = sphi 0, %s67
      %s82 = sphi 0, %s68
      %s88 = sphi 0, %s90
      %s91 = sphi 0, %s88
      %s92 = sphi 0, %s91
      %s108 = sphi 0, %s92
      %s114 = sphi 0, %s116
      %s117 = sphi 0, %s114
      %s118 = sphi 0, %s117
      %s134 = sphi 0, %s118
      %s140 = sphi 0, %s142
      %s143 = sphi 0, %s140
      %s144 = sphi 0, %s143
      %s160 = sphi 0, %s144
    $region4: #{tpu_custom_call.1} parent=1 // loop_header_branch
      %20 = sbr.rel (%p18) target = $region8
    $region5: #{tpu_custom_call.1} parent=1 // loop_body
      %s22 = ssub.s32 %s17, 1
      %s23 = ssub.s32 %s17, 2
      %s30 = sadd.s32 1, %s25
      %p31 = scmp.ge.s32.totalorder %s30, 2
      %s32 = scalar_select %p31, 0, %s30
      %s33 = sadd.s32 1, %s24
      %s34 = scalar_select %p31, %s33, %s24
      %p35 = scmp.ge.s32.totalorder %s34, 2
      %s36 = scalar_select %p35, 0, %s34
      %s37 = ssub.s32 %s24, %s36
      %s38 = ssub.s32 %s25, %s32
      %s39 = sor.u32 %s37, %s38
      %p40 = scmp.eq.s32.totalorder %s39, 0
      %s42 = sadd.s32 %s41, 1
      %s43 = scalar_select %p40, %s41, %s42
      %p46 = pneg %p40
      %p47 = scmp.eq.s32.totalorder %s17, 3
      %p48 = por %p46, %p47
      %p49 = scmp.ne.s32.totalorder %s41, %s44
      %p50 = scmp.eq.s32.totalorder %s17, 0
      %p51 = por %p49, %p50
      %p52 = scmp.ne.s32.totalorder %s41, %s44
      %p53 = scmp.eq.s32.totalorder %s22, 3
      %p54 = por %p52, %p53
      %p55 = scmp.ne.s32.totalorder %s44, %s45
      %p56 = scmp.eq.s32.totalorder %s22, 0
      %p57 = por %p55, %p56
      %p58 = scmp.ne.s32.totalorder %s44, %s45
      %p59 = scmp.eq.s32.totalorder %s23, 3
      %p60 = por %p58, %p59
      %p62 = scmp.ne.s32.totalorder %s45, %s61
      %p63 = scmp.eq.s32.totalorder %s23, 0
      %p64 = por %p62, %p63
      %s66 = sadd.s32 %s65, 1
      %p69 = scmp.eq.s32.totalorder %s17, 3
      %p70 = scmp.ne.s32.totalorder %s65, %s67
      %p71 = scmp.eq.s32.totalorder %s17, 0
      %p72 = por %p70, %p71
      %p73 = scmp.ne.s32.totalorder %s65, %s67
      %p74 = scmp.eq.s32.totalorder %s22, 3
      %p75 = por %p73, %p74
      %p76 = scmp.ne.s32.totalorder %s67, %s68
      %p77 = scmp.eq.s32.totalorder %s22, 0
      %p78 = por %p76, %p77
      %p79 = scmp.ne.s32.totalorder %s67, %s68
      %p80 = scmp.eq.s32.totalorder %s23, 3
      %p81 = por %p79, %p80
      %p83 = scmp.ne.s32.totalorder %s68, %s82
      %p84 = scmp.eq.s32.totalorder %s23, 0
      %p85 = por %p83, %p84
      %s86 = ssub.s32 %s24, %s36
      %p87 = scmp.eq.s32.totalorder %s86, 0
      %s89 = sadd.s32 %s88, 1
      %s90 = scalar_select %p87, %s88, %s89
      %p93 = pneg %p87
      %p94 = scmp.eq.s32.totalorder %s17, 3
      %p95 = por %p93, %p94
      %p96 = scmp.ne.s32.totalorder %s88, %s91
      %p97 = scmp.eq.s32.totalorder %s17, 0
      %p98 = por %p96, %p97
      %p99 = scmp.ne.s32.totalorder %s88, %s91
      %p100 = scmp.eq.s32.totalorder %s22, 3
      %p101 = por %p99, %p100
      %p102 = scmp.ne.s32.totalorder %s91, %s92
      %p103 = scmp.eq.s32.totalorder %s22, 0
      %p104 = por %p102, %p103
      %p105 = scmp.ne.s32.totalorder %s91, %s92
      %p106 = scmp.eq.s32.totalorder %s23, 3
      %p107 = por %p105, %p106
      %p109 = scmp.ne.s32.totalorder %s92, %s108
      %p110 = scmp.eq.s32.totalorder %s23, 0
      %p111 = por %p109, %p110
      %s112 = ssub.s32 %s24, %s36
      %p113 = scmp.eq.s32.totalorder %s112, 0
      %s115 = sadd.s32 %s114, 1
      %s116 = scalar_select %p113, %s114, %s115
      %p119 = pneg %p113
      %p120 = scmp.eq.s32.totalorder %s17, 3
      %p121 = por %p119, %p120
      %p122 = scmp.ne.s32.totalorder %s114, %s117
      %p123 = scmp.eq.s32.totalorder %s17, 0
      %p124 = por %p122, %p123
      %p125 = scmp.ne.s32.totalorder %s114, %s117
      %p126 = scmp.eq.s32.totalorder %s22, 3
      %p127 = por %p125, %p126
      %p128 = scmp.ne.s32.totalorder %s117, %s118
      %p129 = scmp.eq.s32.totalorder %s22, 0
      %p130 = por %p128, %p129
      %p131 = scmp.ne.s32.totalorder %s117, %s118
      %p132 = scmp.eq.s32.totalorder %s23, 3
      %p133 = por %p131, %p132
      %p135 = scmp.ne.s32.totalorder %s118, %s134
      %p136 = scmp.eq.s32.totalorder %s23, 0
      %p137 = por %p135, %p136
      %s138 = ssub.s32 %s24, %s36
      %p139 = scmp.eq.s32.totalorder %s138, 0
      %s141 = sadd.s32 %s140, 1
      %s142 = scalar_select %p139, %s140, %s141
      %p145 = pneg %p139
      %p146 = scmp.eq.s32.totalorder %s17, 3
      %p147 = por %p145, %p146
      %p148 = scmp.ne.s32.totalorder %s140, %s143
      %p149 = scmp.eq.s32.totalorder %s17, 0
      %p150 = por %p148, %p149
      %p151 = scmp.ne.s32.totalorder %s140, %s143
      %p152 = scmp.eq.s32.totalorder %s22, 3
      %p153 = por %p151, %p152
      %p154 = scmp.ne.s32.totalorder %s143, %s144
      %p155 = scmp.eq.s32.totalorder %s22, 0
      %p156 = por %p154, %p155
      %p157 = scmp.ne.s32.totalorder %s143, %s144
      %p158 = scmp.eq.s32.totalorder %s23, 3
      %p159 = por %p157, %p158
      %p161 = scmp.ne.s32.totalorder %s144, %s160
      %p162 = scmp.eq.s32.totalorder %s23, 0
      %p163 = por %p161, %p162
      %p164 = scmp.le.s32.totalorder 1, %s17
      %p165 = scmp.lt.s32.totalorder %s17, 5
      %p166 = pnand %p164, %p165
      %p167 = pneg %p166
      // Predicated region
      $region9: #{tpu_custom_call.1} parent=5 // pred_check
        _
      $region10: #{tpu_custom_call.1} parent=5 // pred_check_branch
        %169 = sbr.rel (%p166) target = $region12
      $region11: #{tpu_custom_call.1} parent=5 // pred_region
        %s170 = ssub.s32 %s17, 1
        // Predicated region
        $region13: #{tpu_custom_call.1} parent=11 // pred_check
          %p171 = pneg %p78
        $region14: #{tpu_custom_call.1} parent=11 // pred_check_branch
          %173 = sbr.rel (%p171) target = $region16
        $region15: #{tpu_custom_call.1} parent=11 // pred_region
          %s175 = ssub.s32 2048, 2048
          %176 = vsyncadd [#allocation4], %s175
          %s177 = sshll.u32 [#allocation3], 4
          %s178 = int_to_ptr.vmem [resolvable:$true] %s177
          %183 = dma.hbm_to_vmem [thread:$0]  %s1, 2048, %s178, [#allocation4], 64, 64, 4
        $region16: #{tpu_custom_call.1} parent=11 // pred_fallthru
          _
      $region12: #{tpu_custom_call.1} parent=5 // pred_fallthru
        _
      %p184 = scmp.lt.s32.totalorder %s17, 4
      // Predicated region
      $region17: #{tpu_custom_call.1} parent=5 // pred_check
        %p185 = pneg %p184
      $region18: #{tpu_custom_call.1} parent=5 // pred_check_branch
        %187 = sbr.rel (%p185) target = $region20
      $region19: #{tpu_custom_call.1} parent=5 // pred_region
        // Predicated region
        $region21: #{tpu_custom_call.1} parent=19 // pred_check
          %p188 = pneg %p51
        $region22: #{tpu_custom_call.1} parent=19 // pred_check_branch
          %190 = sbr.rel (%p188) target = $region24
        $region23: #{tpu_custom_call.1} parent=19 // pred_region
          %s191 = sand.u32 %s41, 1
          %s192 = sand.u32 %s41, 1
          %s193 = smul.addr %s192, 64
          %s194 = scalar_lea.vmem [#allocation2], %s193
          %s195 = smul.u32 16, %s24
          %s196 = smul.addr %s195, 2
          %s197 = sadd.s32 %s25, %s196
          %s198 = smul.addr %s197, 4
          %s199 = scalar_lea.vmem %s0, %s198
          // Predicated region
          $region25: #{tpu_custom_call.1} parent=23 // pred_check
            _
          $region26: #{tpu_custom_call.1} parent=23 // pred_check_branch
            %201 = sbr.rel (0) target = $region28
          $region27: #{tpu_custom_call.1} parent=23 // pred_region
            // Predicated region
            $region29: #{tpu_custom_call.1} parent=27 // pred_check
              _
            $region30: #{tpu_custom_call.1} parent=27 // pred_check_branch
              %203 = sbr.rel target = $region32
            $region31: #{tpu_custom_call.1} parent=27 // pred_region
              // Predicated region
              $region44: #{tpu_custom_call.1} parent=31 // pred_check
                _
              $region45: #{tpu_custom_call.1} parent=31 // pred_check_branch
                %248 = sbr.rel (0) target = $region47
              $region46: #{tpu_custom_call.1} parent=31 // pred_region
                loop: start=0, step=1, limit=1
                $region48: #{tpu_custom_call.1} parent=46 // loop_pre_header
                  _
                $region49: #{tpu_custom_call.1} parent=46 // loop_header
                  %s250 = sphi 0, %s254
                  %p251 = scmp.ge.s32.totalorder %s250, 1
                  %s255 = sphi %s199, %s199
                  %s256 = sphi %s194, %s194
                $region50: #{tpu_custom_call.1} parent=46 // loop_header_branch
                  %253 = sbr.rel (%p251) target = $region54
                $region51: #{tpu_custom_call.1} parent=46 // loop_body
                  _
                $region52: #{tpu_custom_call.1} parent=46 // loop_footer
                  %s254 = sadd.s32 1, %s250
                $region53: #{tpu_custom_call.1} parent=46 // loop_footer_branch
                  %249 = sbr.rel target = $region49
                $region54: #{tpu_custom_call.1} parent=46 // loop_exit
                  _
                loop: start=0, step=1, limit=1
                $region55: #{tpu_custom_call.1} parent=46 // loop_pre_header
                  _
                $region56: #{tpu_custom_call.1} parent=46 // loop_header
                  %s259 = sphi 0, %s263
                  %p260 = scmp.ge.s32.totalorder %s259, 1
                  %s264 = sphi %s199, %s199
                  %s265 = sphi %s194, %s194
                $region57: #{tpu_custom_call.1} parent=46 // loop_header_branch
                  %262 = sbr.rel (%p260) target = $region61
                $region58: #{tpu_custom_call.1} parent=46 // loop_body
                  %v266 = vld [vmem:[%s264] sm:$0xf]
                  %267 = vst [vmem:[%s265] sm:$0xf] %v266
                  %v268 = vld [vmem:[%s264 + $0x8] sm:$0xf]
                  %269 = vst [vmem:[%s265 + $0x4] sm:$0xf] %v268
                  %v270 = vld [vmem:[%s264 + $0x10] sm:$0xf]
                  %271 = vst [vmem:[%s265 + $0x8] sm:$0xf] %v270
                  %v272 = vld [vmem:[%s264 + $0x18] sm:$0xf]
                  %273 = vst [vmem:[%s265 + $0xc] sm:$0xf] %v272
                  %v274 = vld [vmem:[%s264 + $0x20] sm:$0xf]
                  %275 = vst [vmem:[%s265 + $0x10] sm:$0xf] %v274
                  %v276 = vld [vmem:[%s264 + $0x28] sm:$0xf]
                  %277 = vst [vmem:[%s265 + $0x14] sm:$0xf] %v276
                  %v278 = vld [vmem:[%s264 + $0x30] sm:$0xf]
                  %279 = vst [vmem:[%s265 + $0x18] sm:$0xf] %v278
                  %v280 = vld [vmem:[%s264 + $0x38] sm:$0xf]
                  %281 = vst [vmem:[%s265 + $0x1c] sm:$0xf] %v280
                  %v282 = vld [vmem:[%s264 + $0x40] sm:$0xf]
                  %283 = vst [vmem:[%s265 + $0x20] sm:$0xf] %v282
                  %v284 = vld [vmem:[%s264 + $0x48] sm:$0xf]
                  %285 = vst [vmem:[%s265 + $0x24] sm:$0xf] %v284
                  %v286 = vld [vmem:[%s264 + $0x50] sm:$0xf]
                  %287 = vst [vmem:[%s265 + $0x28] sm:$0xf] %v286
                  %v288 = vld [vmem:[%s264 + $0x58] sm:$0xf]
                  %289 = vst [vmem:[%s265 + $0x2c] sm:$0xf] %v288
                  %v290 = vld [vmem:[%s264 + $0x60] sm:$0xf]
                  %291 = vst [vmem:[%s265 + $0x30] sm:$0xf] %v290
                  %v292 = vld [vmem:[%s264 + $0x68] sm:$0xf]
                  %293 = vst [vmem:[%s265 + $0x34] sm:$0xf] %v292
                  %v294 = vld [vmem:[%s264 + $0x70] sm:$0xf]
                  %295 = vst [vmem:[%s265 + $0x38] sm:$0xf] %v294
                  %v296 = vld [vmem:[%s264 + $0x78] sm:$0xf]
                  %297 = vst [vmem:[%s265 + $0x3c] sm:$0xf] %v296
                $region59: #{tpu_custom_call.1} parent=46 // loop_footer
                  %s263 = sadd.s32 1, %s259
                $region60: #{tpu_custom_call.1} parent=46 // loop_footer_branch
                  %258 = sbr.rel target = $region56
                $region61: #{tpu_custom_call.1} parent=46 // loop_exit
                  _
              $region47: #{tpu_custom_call.1} parent=31 // pred_fallthru
                _
            $region32: #{tpu_custom_call.1} parent=27 // pred_fallthru
              _
            // Predicated region
            $region33: #{tpu_custom_call.1} parent=27 // pred_check
              _
            $region34: #{tpu_custom_call.1} parent=27 // pred_check_branch
              %205 = sbr.rel (0) target = $region36
            $region35: #{tpu_custom_call.1} parent=27 // pred_region
              loop: start=0, step=1, limit=1
              $region37: #{tpu_custom_call.1} parent=35 // loop_pre_header
                _
              $region38: #{tpu_custom_call.1} parent=35 // loop_header
                %s208 = sphi 0, %s212
                %p209 = scmp.ge.s32.totalorder %s208, 1
                %s213 = sphi %s199, %s199
                %s214 = sphi %s194, %s194
              $region39: #{tpu_custom_call.1} parent=35 // loop_header_branch
                %211 = sbr.rel (%p209) target = $region43
              $region40: #{tpu_custom_call.1} parent=35 // loop_body
                %v215 = vld [vmem:[%s213] sm:$0xf]
                %216 = vst [vmem:[%s214] sm:$0xf] %v215
                %v217 = vld [vmem:[%s213 + $0x8] sm:$0xf]
                %218 = vst [vmem:[%s214 + $0x4] sm:$0xf] %v217
                %v219 = vld [vmem:[%s213 + $0x10] sm:$0xf]
                %220 = vst [vmem:[%s214 + $0x8] sm:$0xf] %v219
                %v221 = vld [vmem:[%s213 + $0x18] sm:$0xf]
                %222 = vst [vmem:[%s214 + $0xc] sm:$0xf] %v221
                %v223 = vld [vmem:[%s213 + $0x20] sm:$0xf]
                %224 = vst [vmem:[%s214 + $0x10] sm:$0xf] %v223
                %v225 = vld [vmem:[%s213 + $0x28] sm:$0xf]
                %226 = vst [vmem:[%s214 + $0x14] sm:$0xf] %v225
                %v227 = vld [vmem:[%s213 + $0x30] sm:$0xf]
                %228 = vst [vmem:[%s214 + $0x18] sm:$0xf] %v227
                %v229 = vld [vmem:[%s213 + $0x38] sm:$0xf]
                %230 = vst [vmem:[%s214 + $0x1c] sm:$0xf] %v229
                %v231 = vld [vmem:[%s213 + $0x40] sm:$0xf]
                %232 = vst [vmem:[%s214 + $0x20] sm:$0xf] %v231
                %v233 = vld [vmem:[%s213 + $0x48] sm:$0xf]
                %234 = vst [vmem:[%s214 + $0x24] sm:$0xf] %v233
                %v235 = vld [vmem:[%s213 + $0x50] sm:$0xf]
                %236 = vst [vmem:[%s214 + $0x28] sm:$0xf] %v235
                %v237 = vld [vmem:[%s213 + $0x58] sm:$0xf]
                %238 = vst [vmem:[%s214 + $0x2c] sm:$0xf] %v237
                %v239 = vld [vmem:[%s213 + $0x60] sm:$0xf]
                %240 = vst [vmem:[%s214 + $0x30] sm:$0xf] %v239
                %v241 = vld [vmem:[%s213 + $0x68] sm:$0xf]
                %242 = vst [vmem:[%s214 + $0x34] sm:$0xf] %v241
                %v243 = vld [vmem:[%s213 + $0x70] sm:$0xf]
                %244 = vst [vmem:[%s214 + $0x38] sm:$0xf] %v243
                %v245 = vld [vmem:[%s213 + $0x78] sm:$0xf]
                %246 = vst [vmem:[%s214 + $0x3c] sm:$0xf] %v245
              $region41: #{tpu_custom_call.1} parent=35 // loop_footer
                %s212 = sadd.s32 1, %s208
              $region42: #{tpu_custom_call.1} parent=35 // loop_footer_branch
                %207 = sbr.rel target = $region38
              $region43: #{tpu_custom_call.1} parent=35 // loop_exit
                _
            $region36: #{tpu_custom_call.1} parent=27 // pred_fallthru
              _
          $region28: #{tpu_custom_call.1} parent=23 // pred_fallthru
            _
          %298 = vnop
        $region24: #{tpu_custom_call.1} parent=19 // pred_fallthru
          _
        // Predicated region
        $region62: #{tpu_custom_call.1} parent=19 // pred_check
          %p299 = pneg %p98
        $region63: #{tpu_custom_call.1} parent=19 // pred_check_branch
          %301 = sbr.rel (%p299) target = $region65
        $region64: #{tpu_custom_call.1} parent=19 // pred_region
          %s302 = sand.u32 %s88, 1
          %s303 = scalar_lea.sflag [#allocation7], %s302
          %s304 = sand.u32 %s88, 1
          %s305 = smul.addr %s304, 128
          %s306 = scalar_lea.vmem [#allocation6], %s305
          %s307 = smul.u32 16, %s24
          %s309 = ssub.s32 2048, 2048
          %310 = vsyncadd %s303, %s309
          %s311 = smul.addr %s307, 128
          %s312 = scalar_lea.hbm %s2, %s311
          %s313 = sshll.u32 %s306, 4
          %s314 = int_to_ptr.vmem [resolvable:$true] %s313
          %319 = dma.hbm_to_vmem [thread:$0]  %s312, 2048, %s314, %s303, 128, 128, 8
        $region65: #{tpu_custom_call.1} parent=19 // pred_fallthru
          _
        // Predicated region
        $region66: #{tpu_custom_call.1} parent=19 // pred_check
          %p320 = pneg %p124
        $region67: #{tpu_custom_call.1} parent=19 // pred_check_branch
          %322 = sbr.rel (%p320) target = $region69
        $region68: #{tpu_custom_call.1} parent=19 // pred_region
          %s323 = smul.u32 16, %s24
          %p324 = scmp.lt.s32.totalorder %s323, 31
          %s325 = scalar_select %p324, %s323, 31
          %s326 = smul.addr %s325, 8
          %s327 = scalar_lea.vmem %s3, %s326
          %s328 = smul.u32 16, %s24
        $region69: #{tpu_custom_call.1} parent=19 // pred_fallthru
          _
      $region20: #{tpu_custom_call.1} parent=5 // pred_fallthru
        _
      %p329 = scmp.le.s32.totalorder 1, %s17
      %p330 = scmp.lt.s32.totalorder %s17, 5
      %p331 = pnand %p329, %p330
      %p332 = pneg %p331
      // Predicated region
      $region70: #{tpu_custom_call.1} parent=5 // pred_check
        _
      $region71: #{tpu_custom_call.1} parent=5 // pred_check_branch
        %334 = sbr.rel (%p331) target = $region73
      $region72: #{tpu_custom_call.1} parent=5 // pred_region
        %s335 = ssub.s32 %s17, 1
        %s336 = sand.u32 %s44, 1
        %s337 = sand.u32 %s44, 1
        %s338 = smul.addr %s337, 64
        %s339 = scalar_lea.vmem [#allocation2], %s338
        // Predicated region
        $region74: #{tpu_custom_call.1} parent=72 // pred_check
          %p340 = pneg %p57
        $region75: #{tpu_custom_call.1} parent=72 // pred_check_branch
          %342 = sbr.rel (%p340) target = $region77
        $region76: #{tpu_custom_call.1} parent=72 // pred_region
          _
        $region77: #{tpu_custom_call.1} parent=72 // pred_fallthru
          _
        // Predicated region
        $region78: #{tpu_custom_call.1} parent=72 // pred_check
          %p343 = pneg %p78
        $region79: #{tpu_custom_call.1} parent=72 // pred_check_branch
          %345 = sbr.rel (%p343) target = $region81
        $region80: #{tpu_custom_call.1} parent=72 // pred_region
          %346 = dma.done [#allocation4], 2048
        $region81: #{tpu_custom_call.1} parent=72 // pred_fallthru
          _
        %s347 = sand.u32 %s91, 1
        %s348 = scalar_lea.sflag [#allocation7], %s347
        %s349 = sand.u32 %s91, 1
        %s350 = smul.addr %s349, 128
        %s351 = scalar_lea.vmem [#allocation6], %s350
        // Predicated region
        $region82: #{tpu_custom_call.1} parent=72 // pred_check
          %p352 = pneg %p104
        $region83: #{tpu_custom_call.1} parent=72 // pred_check_branch
          %354 = sbr.rel (%p352) target = $region85
        $region84: #{tpu_custom_call.1} parent=72 // pred_region
          %355 = dma.done %s348, 2048
        $region85: #{tpu_custom_call.1} parent=72 // pred_fallthru
          _
        %s356 = sand.u32 %s44, 1
        %s357 = sand.u32 %s44, 1
        %s358 = smul.addr %s357, 64
        %s359 = scalar_lea.vmem [#allocation2], %s358
        %p360 = pneg %p57
        %p361 = pneg %p54
        %p362 = pneg %p78
        %p363 = pneg %p75
        %s364 = sand.u32 %s91, 1
        %s365 = scalar_lea.sflag [#allocation7], %s364
        %s366 = sand.u32 %s91, 1
        %s367 = smul.addr %s366, 128
        %s368 = scalar_lea.vmem [#allocation6], %s367
        %p369 = pneg %p104
        %p370 = pneg %p101
        %s371 = smul.u32 16, %s26
        %p372 = scmp.lt.s32.totalorder %s371, 31
        %s373 = scalar_select %p372, %s371, 31
        %s374 = smul.addr %s373, 8
        %s375 = scalar_lea.vmem %s3, %s374
        %p376 = pneg %p130
        %p377 = pneg %p127
        %p378 = pneg %p156
        %p379 = pneg %p153
        %s380 = sand.u32 %s143, 1
        %s381 = scalar_lea.sflag [#allocation5], %s380
        %s382 = sand.u32 %s143, 1
        %s383 = smul.addr %s382, 128
        %s384 = scalar_lea.vmem [#allocation8], %s383
        %s385 = smul.u32 16, %s26
        %s386 = smul.u32 16, %s26
        %s387 = smul.u32 16, %s26
        %p388 = scmp.lt.s32.totalorder %s387, 31
        %s389 = scalar_select %p388, %s387, 31
        %s390 = smul.addr %s389, 8
        %s391 = scalar_lea.vmem %s3, %s390
        %s392 = smul.u32 16, %s26
        %s393 = smul.u32 16, %s26
        %p395 = scmp.eq.s32.totalorder %s27, 0
        // Predicated region
        $region86: #{tpu_custom_call.1} parent=72 // pred_check
          %p396 = pneg %p395
        $region87: #{tpu_custom_call.1} parent=72 // pred_check_branch
          %398 = sbr.rel (%p396) target = $region89
        $region88: #{tpu_custom_call.1} parent=72 // pred_region
          %399 = vst [vmem:[%s384] sm:$0xff] 0.0
          %400 = vst [vmem:[%s384 + $0x8] sm:$0xff] 0.0
          %401 = vst [vmem:[%s384 + $0x10] sm:$0xff] 0.0
          %402 = vst [vmem:[%s384 + $0x18] sm:$0xff] 0.0
          %403 = vst [vmem:[%s384 + $0x20] sm:$0xff] 0.0
          %404 = vst [vmem:[%s384 + $0x28] sm:$0xff] 0.0
          %405 = vst [vmem:[%s384 + $0x30] sm:$0xff] 0.0
          %406 = vst [vmem:[%s384 + $0x38] sm:$0xff] 0.0
          %407 = vst [vmem:[%s384 + $0x40] sm:$0xff] 0.0
          %408 = vst [vmem:[%s384 + $0x48] sm:$0xff] 0.0
          %409 = vst [vmem:[%s384 + $0x50] sm:$0xff] 0.0
          %410 = vst [vmem:[%s384 + $0x58] sm:$0xff] 0.0
          %411 = vst [vmem:[%s384 + $0x60] sm:$0xff] 0.0
          %412 = vst [vmem:[%s384 + $0x68] sm:$0xff] 0.0
          %413 = vst [vmem:[%s384 + $0x70] sm:$0xff] 0.0
          %414 = vst [vmem:[%s384 + $0x78] sm:$0xff] 0.0
        $region89: #{tpu_custom_call.1} parent=72 // pred_fallthru
          _
        %s415 = smul.u32 %s27, 128
        %s416 = sshra.s32 %s415, 3
        %s417 = sand.u32 %s415, 7
        %s418 = smul.addr %s416, 4
        %s419 = scalar_lea.vmem [#allocation3], %s418
        %v420 = vld [vmem:[%s419] sm:$0xf]
        %v421 = vld [vmem:[%s419 + $0x4] sm:$0xf]
        %v422 = vld [vmem:[%s419 + $0x8] sm:$0xf]
        %v423 = vld [vmem:[%s419 + $0xc] sm:$0xf]
        %v424 = vld [vmem:[%s419 + $0x10] sm:$0xf]
        %v425 = vld [vmem:[%s419 + $0x14] sm:$0xf]
        %v426 = vld [vmem:[%s419 + $0x18] sm:$0xf]
        %v427 = vld [vmem:[%s419 + $0x1c] sm:$0xf]
        %v428 = vld [vmem:[%s419 + $0x20] sm:$0xf]
        %v429 = vld [vmem:[%s419 + $0x24] sm:$0xf]
        %v430 = vld [vmem:[%s419 + $0x28] sm:$0xf]
        %v431 = vld [vmem:[%s419 + $0x2c] sm:$0xf]
        %v432 = vld [vmem:[%s419 + $0x30] sm:$0xf]
        %v433 = vld [vmem:[%s419 + $0x34] sm:$0xf]
        %v434 = vld [vmem:[%s419 + $0x38] sm:$0xf]
        %v435 = vld [vmem:[%s419 + $0x3c] sm:$0xf]
        %v436 = vld [vmem:[%s384] sm:$0xff]
        %v437 = vld [vmem:[%s384 + $0x8] sm:$0xff]
        %v438 = vld [vmem:[%s384 + $0x10] sm:$0xff]
        %v439 = vld [vmem:[%s384 + $0x18] sm:$0xff]
        %v440 = vld [vmem:[%s384 + $0x20] sm:$0xff]
        %v441 = vld [vmem:[%s384 + $0x28] sm:$0xff]
        %v442 = vld [vmem:[%s384 + $0x30] sm:$0xff]
        %v443 = vld [vmem:[%s384 + $0x38] sm:$0xff]
        %v444 = vld [vmem:[%s384 + $0x40] sm:$0xff]
        %v445 = vld [vmem:[%s384 + $0x48] sm:$0xff]
        %v446 = vld [vmem:[%s384 + $0x50] sm:$0xff]
        %v447 = vld [vmem:[%s384 + $0x58] sm:$0xff]
        %v448 = vld [vmem:[%s384 + $0x60] sm:$0xff]
        %v449 = vld [vmem:[%s384 + $0x68] sm:$0xff]
        %v450 = vld [vmem:[%s384 + $0x70] sm:$0xff]
        %v451 = vld [vmem:[%s384 + $0x78] sm:$0xff]
        %v452 = vld [vmem:[%s339] sm:$0xf]
        %v453 = vld [vmem:[%s339 + $0x4] sm:$0xf]
        %v454 = vld [vmem:[%s339 + $0x8] sm:$0xf]
        %v455 = vld [vmem:[%s339 + $0xc] sm:$0xf]
        %v456 = vld [vmem:[%s339 + $0x10] sm:$0xf]
        %v457 = vld [vmem:[%s339 + $0x14] sm:$0xf]
        %v458 = vld [vmem:[%s339 + $0x18] sm:$0xf]
        %v459 = vld [vmem:[%s339 + $0x1c] sm:$0xf]
        %v460 = vld [vmem:[%s339 + $0x20] sm:$0xf]
        %v461 = vld [vmem:[%s339 + $0x24] sm:$0xf]
        %v462 = vld [vmem:[%s339 + $0x28] sm:$0xf]
        %v463 = vld [vmem:[%s339 + $0x2c] sm:$0xf]
        %v464 = vld [vmem:[%s339 + $0x30] sm:$0xf]
        %v465 = vld [vmem:[%s339 + $0x34] sm:$0xf]
        %v466 = vld [vmem:[%s339 + $0x38] sm:$0xf]
        %v467 = vld [vmem:[%s339 + $0x3c] sm:$0xf]
        %v484 = vunpack.c.l.b16 %v452
        %v485 = vunpack.c.l.b16 %v453
        %v486 = vunpack.c.l.b16 %v454
        %v487 = vunpack.c.l.b16 %v455
        %v488 = vunpack.c.l.b16 %v456
        %v489 = vunpack.c.l.b16 %v457
        %v490 = vunpack.c.l.b16 %v458
        %v491 = vunpack.c.l.b16 %v459
        %v492 = vunpack.c.l.b16 %v460
        %v493 = vunpack.c.l.b16 %v461
        %v494 = vunpack.c.l.b16 %v462
        %v495 = vunpack.c.l.b16 %v463
        %v496 = vunpack.c.l.b16 %v464
        %v497 = vunpack.c.l.b16 %v465
        %v498 = vunpack.c.l.b16 %v466
        %v499 = vunpack.c.l.b16 %v467
        %v500 = vpack.c.b16 %v485, %v484
        %v501 = vpack.c.b16 %v487, %v486
        %v502 = vpack.c.b16 %v489, %v488
        %v503 = vpack.c.b16 %v491, %v490
        %v504 = vpack.c.b16 %v493, %v492
        %v505 = vpack.c.b16 %v495, %v494
        %v506 = vpack.c.b16 %v497, %v496
        %v507 = vpack.c.b16 %v499, %v498
        %v532 = vunpack.c.l.b16 %v420
        %v533 = vunpack.c.l.b16 %v421
        %v534 = vunpack.c.l.b16 %v422
        %v535 = vunpack.c.l.b16 %v423
        %v536 = vunpack.c.l.b16 %v424
        %v537 = vunpack.c.l.b16 %v425
        %v538 = vunpack.c.l.b16 %v426
        %v539 = vunpack.c.l.b16 %v427
        %v540 = vunpack.c.l.b16 %v428
        %v541 = vunpack.c.l.b16 %v429
        %v542 = vunpack.c.l.b16 %v430
        %v543 = vunpack.c.l.b16 %v431
        %v544 = vunpack.c.l.b16 %v432
        %v545 = vunpack.c.l.b16 %v433
        %v546 = vunpack.c.l.b16 %v434
        %v547 = vunpack.c.l.b16 %v435
        %v548 = vpack.c.b16 %v533, %v532
        %v549 = vpack.c.b16 %v535, %v534
        %v550 = vpack.c.b16 %v537, %v536
        %v551 = vpack.c.b16 %v539, %v538
        %v552 = vpack.c.b16 %v541, %v540
        %v553 = vpack.c.b16 %v543, %v542
        %v554 = vpack.c.b16 %v545, %v544
        %v555 = vpack.c.b16 %v547, %v546
        %564 = vmatprep.subr.bf16.mxu0 0
        %565 = vmatpush1.bf16.msra.mxu0 %v548
        %566 = vmatprep.subr.bf16.mxu0 0
        %567 = vmatpush1.bf16.msra.mxu0 %v549
        %568 = vmatprep.subr.bf16.mxu0 0
        %569 = vmatpush1.bf16.msra.mxu0 %v550
        %570 = vmatprep.subr.bf16.mxu0 0
        %571 = vmatpush1.bf16.msra.mxu0 %v551
        %572 = vmatprep.subr.bf16.mxu0 0
        %573 = vmatpush1.bf16.msra.mxu0 %v552
        %574 = vmatprep.subr.bf16.mxu0 0
        %575 = vmatpush1.bf16.msra.mxu0 %v553
        %576 = vmatprep.subr.bf16.mxu0 0
        %577 = vmatpush1.bf16.msra.mxu0 %v554
        %578 = vmatprep.subr.bf16.mxu0 0
        %579 = vmatpush1.bf16.msra.mxu0 %v555
        %580 = vmatprep.subr.bf16.mxu0 0
        %581 = vmatpush1.bf16.msra.mxu0 0
        %582 = vmatprep.subr.bf16.mxu0 0
        %583 = vmatpush1.bf16.msra.mxu0 0
        %584 = vmatprep.subr.bf16.mxu0 0
        %585 = vmatpush1.bf16.msra.mxu0 0
        %586 = vmatprep.subr.bf16.mxu0 0
        %587 = vmatpush1.bf16.msra.mxu0 0
        %588 = vmatprep.subr.bf16.mxu0 0
        %589 = vmatpush1.bf16.msra.mxu0 0
        %590 = vmatprep.subr.bf16.mxu0 0
        %591 = vmatpush1.bf16.msra.mxu0 0
        %592 = vmatprep.subr.bf16.mxu0 0
        %593 = vmatpush1.bf16.msra.mxu0 0
        %594 = vmatprep.subr.bf16.mxu0 0
        %595 = vmatpush1.bf16.msra.mxu0 0
        %596 = vmatprep.mubr.bf16.mxu0 0
        %597 = vmatmul.mubr.bf16.gmra.mrb[0].mxu0 %v500
        %v598 = vpop.f32.mrb[0].mxu0
        %v599 = vadd.f32 0.0, %v598
        %v600 = vpop.f32.mrb[0].mxu0
        %v601 = vpop.f32.mrb[0].mxu0
        %v602 = vadd.f32 0.0, %v601
        %v603 = vpop.f32.mrb[0].mxu0
        %604 = vmatprep.mubr.bf16.mxu0 0
        %605 = vmatmul.mubr.bf16.gmra.mrb[0].mxu0 %v501
        %v606 = vpop.f32.mrb[0].mxu0
        %v607 = vadd.f32 0.0, %v606
        %v608 = vpop.f32.mrb[0].mxu0
        %v609 = vpop.f32.mrb[0].mxu0
        %v610 = vadd.f32 0.0, %v609
        %v611 = vpop.f32.mrb[0].mxu0
        %612 = vmatprep.mubr.bf16.mxu0 0
        %613 = vmatmul.mubr.bf16.gmra.mrb[0].mxu0 %v502
        %v614 = vpop.f32.mrb[0].mxu0
        %v615 = vadd.f32 0.0, %v614
        %v616 = vpop.f32.mrb[0].mxu0
        %v617 = vpop.f32.mrb[0].mxu0
        %v618 = vadd.f32 0.0, %v617
        %v619 = vpop.f32.mrb[0].mxu0
        %620 = vmatprep.mubr.bf16.mxu0 0
        %621 = vmatmul.mubr.bf16.gmra.mrb[0].mxu0 %v503
        %v622 = vpop.f32.mrb[0].mxu0
        %v623 = vadd.f32 0.0, %v622
        %v624 = vpop.f32.mrb[0].mxu0
        %v625 = vpop.f32.mrb[0].mxu0
        %v626 = vadd.f32 0.0, %v625
        %v627 = vpop.f32.mrb[0].mxu0
        %628 = vmatprep.mubr.bf16.mxu0 0
        %629 = vmatmul.mubr.bf16.gmra.mrb[0].mxu0 %v504
        %v630 = vpop.f32.mrb[0].mxu0
        %v631 = vadd.f32 0.0, %v630
        %v632 = vpop.f32.mrb[0].mxu0
        %v633 = vpop.f32.mrb[0].mxu0
        %v634 = vadd.f32 0.0, %v633
        %v635 = vpop.f32.mrb[0].mxu0
        %636 = vmatprep.mubr.bf16.mxu0 0
        %637 = vmatmul.mubr.bf16.gmra.mrb[0].mxu0 %v505
        %v638 = vpop.f32.mrb[0].mxu0
        %v639 = vadd.f32 0.0, %v638
        %v640 = vpop.f32.mrb[0].mxu0
        %v641 = vpop.f32.mrb[0].mxu0
        %v642 = vadd.f32 0.0, %v641
        %v643 = vpop.f32.mrb[0].mxu0
        %644 = vmatprep.mubr.bf16.mxu0 0
        %645 = vmatmul.mubr.bf16.gmra.mrb[0].mxu0 %v506
        %v646 = vpop.f32.mrb[0].mxu0
        %v647 = vadd.f32 0.0, %v646
        %v648 = vpop.f32.mrb[0].mxu0
        %v649 = vpop.f32.mrb[0].mxu0
        %v650 = vadd.f32 0.0, %v649
        %v651 = vpop.f32.mrb[0].mxu0
        %652 = vmatprep.mubr.bf16.mxu0 0
        %653 = vmatmul.mubr.bf16.gmra.mrb[0].mxu0 %v507
        %v654 = vpop.f32.mrb[0].mxu0
        %v655 = vadd.f32 0.0, %v654
        %v656 = vpop.f32.mrb[0].mxu0
        %v657 = vpop.f32.mrb[0].mxu0
        %v658 = vadd.f32 0.0, %v657
        %v659 = vpop.f32.mrb[0].mxu0
        %660 = vdwg.mxu0
        %v661 = vadd.f32 %v436, %v599
        %v662 = vadd.f32 %v437, %v602
        %v663 = vadd.f32 %v438, %v607
        %v664 = vadd.f32 %v439, %v610
        %v665 = vadd.f32 %v440, %v615
        %v666 = vadd.f32 %v441, %v618
        %v667 = vadd.f32 %v442, %v623
        %v668 = vadd.f32 %v443, %v626
        %v669 = vadd.f32 %v444, %v631
        %v670 = vadd.f32 %v445, %v634
        %v671 = vadd.f32 %v446, %v639
        %v672 = vadd.f32 %v447, %v642
        %v673 = vadd.f32 %v448, %v647
        %v674 = vadd.f32 %v449, %v650
        %v675 = vadd.f32 %v450, %v655
        %v676 = vadd.f32 %v451, %v658
        %677 = vst [vmem:[%s384] sm:$0xff] %v661
        %678 = vst [vmem:[%s384 + $0x8] sm:$0xff] %v662
        %679 = vst [vmem:[%s384 + $0x10] sm:$0xff] %v663
        %680 = vst [vmem:[%s384 + $0x18] sm:$0xff] %v664
        %681 = vst [vmem:[%s384 + $0x20] sm:$0xff] %v665
        %682 = vst [vmem:[%s384 + $0x28] sm:$0xff] %v666
        %683 = vst [vmem:[%s384 + $0x30] sm:$0xff] %v667
        %684 = vst [vmem:[%s384 + $0x38] sm:$0xff] %v668
        %685 = vst [vmem:[%s384 + $0x40] sm:$0xff] %v669
        %686 = vst [vmem:[%s384 + $0x48] sm:$0xff] %v670
        %687 = vst [vmem:[%s384 + $0x50] sm:$0xff] %v671
        %688 = vst [vmem:[%s384 + $0x58] sm:$0xff] %v672
        %689 = vst [vmem:[%s384 + $0x60] sm:$0xff] %v673
        %690 = vst [vmem:[%s384 + $0x68] sm:$0xff] %v674
        %691 = vst [vmem:[%s384 + $0x70] sm:$0xff] %v675
        %692 = vst [vmem:[%s384 + $0x78] sm:$0xff] %v676
        %p693 = scmp.eq.s32.totalorder %s27, 1
        // Predicated region
        $region90: #{tpu_custom_call.1} parent=72 // pred_check
          %p694 = pneg %p693
        $region91: #{tpu_custom_call.1} parent=72 // pred_check_branch
          %696 = sbr.rel (%p694) target = $region93
        $region92: #{tpu_custom_call.1} parent=72 // pred_region
          %v697 = vld [vmem:[%s384] sm:$0xff]
          %v698 = vld [vmem:[%s384 + $0x8] sm:$0xff]
          %v699 = vld [vmem:[%s384 + $0x10] sm:$0xff]
          %v700 = vld [vmem:[%s384 + $0x18] sm:$0xff]
          %v701 = vld [vmem:[%s384 + $0x20] sm:$0xff]
          %v702 = vld [vmem:[%s384 + $0x28] sm:$0xff]
          %v703 = vld [vmem:[%s384 + $0x30] sm:$0xff]
          %v704 = vld [vmem:[%s384 + $0x38] sm:$0xff]
          %v705 = vld [vmem:[%s384 + $0x40] sm:$0xff]
          %v706 = vld [vmem:[%s384 + $0x48] sm:$0xff]
          %v707 = vld [vmem:[%s384 + $0x50] sm:$0xff]
          %v708 = vld [vmem:[%s384 + $0x58] sm:$0xff]
          %v709 = vld [vmem:[%s384 + $0x60] sm:$0xff]
          %v710 = vld [vmem:[%s384 + $0x68] sm:$0xff]
          %v711 = vld [vmem:[%s384 + $0x70] sm:$0xff]
          %v712 = vld [vmem:[%s384 + $0x78] sm:$0xff]
          %v713 = vld [vmem:[%s391] sm:$0xff]
          %v714 = vld [vmem:[%s391 + $0x8] sm:$0xff]
          %v715 = vld [vmem:[%s391 + $0x10] sm:$0xff]
          %v716 = vld [vmem:[%s391 + $0x18] sm:$0xff]
          %v717 = vld [vmem:[%s391 + $0x20] sm:$0xff]
          %v718 = vld [vmem:[%s391 + $0x28] sm:$0xff]
          %v719 = vld [vmem:[%s391 + $0x30] sm:$0xff]
          %v720 = vld [vmem:[%s391 + $0x38] sm:$0xff]
          %v721 = vld [vmem:[%s391 + $0x40] sm:$0xff]
          %v722 = vld [vmem:[%s391 + $0x48] sm:$0xff]
          %v723 = vld [vmem:[%s391 + $0x50] sm:$0xff]
          %v724 = vld [vmem:[%s391 + $0x58] sm:$0xff]
          %v725 = vld [vmem:[%s391 + $0x60] sm:$0xff]
          %v726 = vld [vmem:[%s391 + $0x68] sm:$0xff]
          %v727 = vld [vmem:[%s391 + $0x70] sm:$0xff]
          %v728 = vld [vmem:[%s391 + $0x78] sm:$0xff]
          %730 = vset.pattern.permute.xlu0 0
          %731 = vperm.xlu0 %730, %v713
          %v732 = vpop.permute.xlu0 %731
          %735 = vset.pattern.permute.xlu0 0
          %736 = vperm.xlu0 %735, %v714
          %v737 = vpop.permute.xlu0 %736
          %740 = vset.pattern.permute.xlu0 0
          %741 = vperm.xlu0 %740, %v715
          %v742 = vpop.permute.xlu0 %741
          %745 = vset.pattern.permute.xlu0 0
          %746 = vperm.xlu0 %745, %v716
          %v747 = vpop.permute.xlu0 %746
          %750 = vset.pattern.permute.xlu0 0
          %751 = vperm.xlu0 %750, %v717
          %v752 = vpop.permute.xlu0 %751
          %755 = vset.pattern.permute.xlu0 0
          %756 = vperm.xlu0 %755, %v718
          %v757 = vpop.permute.xlu0 %756
          %760 = vset.pattern.permute.xlu0 0
          %761 = vperm.xlu0 %760, %v719
          %v762 = vpop.permute.xlu0 %761
          %765 = vset.pattern.permute.xlu0 0
          %766 = vperm.xlu0 %765, %v720
          %v767 = vpop.permute.xlu0 %766
          %770 = vset.pattern.permute.xlu0 0
          %771 = vperm.xlu0 %770, %v721
          %v772 = vpop.permute.xlu0 %771
          %775 = vset.pattern.permute.xlu0 0
          %776 = vperm.xlu0 %775, %v722
          %v777 = vpop.permute.xlu0 %776
          %780 = vset.pattern.permute.xlu0 0
          %781 = vperm.xlu0 %780, %v723
          %v782 = vpop.permute.xlu0 %781
          %785 = vset.pattern.permute.xlu0 0
          %786 = vperm.xlu0 %785, %v724
          %v787 = vpop.permute.xlu0 %786
          %790 = vset.pattern.permute.xlu0 0
          %791 = vperm.xlu0 %790, %v725
          %v792 = vpop.permute.xlu0 %791
          %795 = vset.pattern.permute.xlu0 0
          %796 = vperm.xlu0 %795, %v726
          %v797 = vpop.permute.xlu0 %796
          %800 = vset.pattern.permute.xlu0 0
          %801 = vperm.xlu0 %800, %v727
          %v802 = vpop.permute.xlu0 %801
          %805 = vset.pattern.permute.xlu0 0
          %806 = vperm.xlu0 %805, %v728
          %v807 = vpop.permute.xlu0 %806
          %v809 = vmul.f32 %v697, %v732
          %v810 = vmul.f32 %v698, %v737
          %v811 = vmul.f32 %v699, %v742
          %v812 = vmul.f32 %v700, %v747
          %v813 = vmul.f32 %v701, %v752
          %v814 = vmul.f32 %v702, %v757
          %v815 = vmul.f32 %v703, %v762
          %v816 = vmul.f32 %v704, %v767
          %v817 = vmul.f32 %v705, %v772
          %v818 = vmul.f32 %v706, %v777
          %v819 = vmul.f32 %v707, %v782
          %v820 = vmul.f32 %v708, %v787
          %v821 = vmul.f32 %v709, %v792
          %v822 = vmul.f32 %v710, %v797
          %v823 = vmul.f32 %v711, %v802
          %v824 = vmul.f32 %v712, %v807
          %v825 = vld [vmem:[%s351] sm:$0xff]
          %v826 = vld [vmem:[%s351 + $0x8] sm:$0xff]
          %v827 = vld [vmem:[%s351 + $0x10] sm:$0xff]
          %v828 = vld [vmem:[%s351 + $0x18] sm:$0xff]
          %v829 = vld [vmem:[%s351 + $0x20] sm:$0xff]
          %v830 = vld [vmem:[%s351 + $0x28] sm:$0xff]
          %v831 = vld [vmem:[%s351 + $0x30] sm:$0xff]
          %v832 = vld [vmem:[%s351 + $0x38] sm:$0xff]
          %v833 = vld [vmem:[%s351 + $0x40] sm:$0xff]
          %v834 = vld [vmem:[%s351 + $0x48] sm:$0xff]
          %v835 = vld [vmem:[%s351 + $0x50] sm:$0xff]
          %v836 = vld [vmem:[%s351 + $0x58] sm:$0xff]
          %v837 = vld [vmem:[%s351 + $0x60] sm:$0xff]
          %v838 = vld [vmem:[%s351 + $0x68] sm:$0xff]
          %v839 = vld [vmem:[%s351 + $0x70] sm:$0xff]
          %v840 = vld [vmem:[%s351 + $0x78] sm:$0xff]
          %v841 = vadd.f32 %v809, %v825
          %v842 = vadd.f32 %v810, %v826
          %v843 = vadd.f32 %v811, %v827
          %v844 = vadd.f32 %v812, %v828
          %v845 = vadd.f32 %v813, %v829
          %v846 = vadd.f32 %v814, %v830
          %v847 = vadd.f32 %v815, %v831
          %v848 = vadd.f32 %v816, %v832
          %v849 = vadd.f32 %v817, %v833
          %v850 = vadd.f32 %v818, %v834
          %v851 = vadd.f32 %v819, %v835
          %v852 = vadd.f32 %v820, %v836
          %v853 = vadd.f32 %v821, %v837
          %v854 = vadd.f32 %v822, %v838
          %v855 = vadd.f32 %v823, %v839
          %v856 = vadd.f32 %v824, %v840
          %v857 = vmax.f32 %v841, 0.0
          %v858 = vmax.f32 %v842, 0.0
          %v859 = vmax.f32 %v843, 0.0
          %v860 = vmax.f32 %v844, 0.0
          %v861 = vmax.f32 %v845, 0.0
          %v862 = vmax.f32 %v846, 0.0
          %v863 = vmax.f32 %v847, 0.0
          %v864 = vmax.f32 %v848, 0.0
          %v865 = vmax.f32 %v849, 0.0
          %v866 = vmax.f32 %v850, 0.0
          %v867 = vmax.f32 %v851, 0.0
          %v868 = vmax.f32 %v852, 0.0
          %v869 = vmax.f32 %v853, 0.0
          %v870 = vmax.f32 %v854, 0.0
          %v871 = vmax.f32 %v855, 0.0
          %v872 = vmax.f32 %v856, 0.0
          %873 = vst [vmem:[%s384] sm:$0xff] %v857
          %874 = vst [vmem:[%s384 + $0x8] sm:$0xff] %v858
          %875 = vst [vmem:[%s384 + $0x10] sm:$0xff] %v859
          %876 = vst [vmem:[%s384 + $0x18] sm:$0xff] %v860
          %877 = vst [vmem:[%s384 + $0x20] sm:$0xff] %v861
          %878 = vst [vmem:[%s384 + $0x28] sm:$0xff] %v862
          %879 = vst [vmem:[%s384 + $0x30] sm:$0xff] %v863
          %880 = vst [vmem:[%s384 + $0x38] sm:$0xff] %v864
          %881 = vst [vmem:[%s384 + $0x40] sm:$0xff] %v865
          %882 = vst [vmem:[%s384 + $0x48] sm:$0xff] %v866
          %883 = vst [vmem:[%s384 + $0x50] sm:$0xff] %v867
          %884 = vst [vmem:[%s384 + $0x58] sm:$0xff] %v868
          %885 = vst [vmem:[%s384 + $0x60] sm:$0xff] %v869
          %886 = vst [vmem:[%s384 + $0x68] sm:$0xff] %v870
          %887 = vst [vmem:[%s384 + $0x70] sm:$0xff] %v871
          %888 = vst [vmem:[%s384 + $0x78] sm:$0xff] %v872
        $region93: #{tpu_custom_call.1} parent=72 // pred_fallthru
          _
        %s889 = sand.u32 %s143, 1
        %s890 = scalar_lea.sflag [#allocation5], %s889
        %s891 = sand.u32 %s143, 1
        %s892 = smul.addr %s891, 128
        %s893 = scalar_lea.vmem [#allocation8], %s892
        // Predicated region
        $region94: #{tpu_custom_call.1} parent=72 // pred_check
          %p894 = pneg %p153
        $region95: #{tpu_custom_call.1} parent=72 // pred_check_branch
          %896 = sbr.rel (%p894) target = $region97
        $region96: #{tpu_custom_call.1} parent=72 // pred_region
          %s897 = smul.u32 16, %s26
          %s899 = ssub.s32 2048, 2048
          %900 = vsyncadd %s890, %s899
          %s901 = smul.addr %s897, 128
          %s902 = scalar_lea.hbm %s4, %s901
          %s903 = sshll.u32 %s893, 4
          %s904 = int_to_ptr.vmem [resolvable:$true] %s903
          %909 = dma.vmem_to_hbm [thread:$0]  %s904, 2048, %s902, %s890, 128, 128, 8
        $region97: #{tpu_custom_call.1} parent=72 // pred_fallthru
          _
      $region73: #{tpu_custom_call.1} parent=5 // pred_fallthru
        _
      %p910 = scmp.le.s32.totalorder 2, %s17
      // Predicated region
      $region98: #{tpu_custom_call.1} parent=5 // pred_check
        %p911 = pneg %p910
      $region99: #{tpu_custom_call.1} parent=5 // pred_check_branch
        %913 = sbr.rel (%p911) target = $region101
      $region100: #{tpu_custom_call.1} parent=5 // pred_region
        %s914 = ssub.s32 %s17, 2
        // Predicated region
        $region102: #{tpu_custom_call.1} parent=100 // pred_check
          %p915 = pneg %p159
        $region103: #{tpu_custom_call.1} parent=100 // pred_check_branch
          %917 = sbr.rel (%p915) target = $region105
        $region104: #{tpu_custom_call.1} parent=100 // pred_region
          %s918 = sand.u32 %s144, 1
          %s919 = scalar_lea.sflag [#allocation5], %s918
          %s920 = sand.u32 %s144, 1
          %s921 = smul.addr %s920, 128
          %s922 = scalar_lea.vmem [#allocation8], %s921
          %923 = dma.done %s919, 2048
        $region105: #{tpu_custom_call.1} parent=100 // pred_fallthru
          _
      $region101: #{tpu_custom_call.1} parent=5 // pred_fallthru
        _
    $region6: #{tpu_custom_call.1} parent=1 // loop_footer
      %s21 = sadd.s32 1, %s17
    $region7: #{tpu_custom_call.1} parent=1 // loop_footer_branch
      %16 = sbr.rel target = $region3
    $region8: #{tpu_custom_call.1} parent=1 // loop_exit
      _
    %924 = vsyncpa [#allocation4], 1
    %s925 = scalar_lea.sflag [#allocation4], 1
    %926 = vsyncpa %s925, 1
    %927 = vsyncpa [#allocation7], 1
    %s928 = scalar_lea.sflag [#allocation7], 1
    %929 = vsyncpa %s928, 1
    %930 = vsyncpa [#allocation5], 1
    %s931 = scalar_lea.sflag [#allocation5], 1
    %932 = vsyncpa %s931, 1

</llo_original>
